<compile_context>
chip_gen: v5e
topology: v5e:2x2
jax: 0.10.0
libtpu: 0.0.40
codegen_flags: <defaults>
</compile_context>

<pallas_src>
import jax
import jax.numpy as jnp
from jax.experimental import pallas as pl
from jax.experimental.pallas import tpu as pltpu


def _seg_width(n_action, hidden_sizes):
    """Lane-aligned (multiple of 128) column stride for each packed weight segment."""
    widest = max(tuple(hidden_sizes) + (n_action, 1))
    return ((widest + 127) // 128) * 128


def _make_kernel(n_state, n_action, hidden_sizes):
    dims = [n_state] + list(hidden_sizes)
    n_hidden = len(hidden_sizes)
    seg = _seg_width(n_action, hidden_sizes)

    def kernel(x_ref, wp_ref, bp_ref, q_ref):
        # Hidden MLP stack: Linear (bf16 MXU operands, f32 accum) + f32 bias + ReLU.
        h = x_ref[...]
        for i in range(n_hidden):
            fin, fout, c = dims[i], dims[i + 1], i * seg
            z = jnp.dot(h.astype(jnp.bfloat16), wp_ref[:fin, c:c + fout],
                        preferred_element_type=jnp.float32)
            h = jnp.maximum(z + bp_ref[:, c:c + fout], 0.0)

        hb = h.astype(jnp.bfloat16)
        fin = dims[-1]
        ca = n_hidden * seg        # advantage columns (lane offset, 128-aligned)
        cb = (n_hidden + 1) * seg  # fused (value - mean(adv)) column

        # Advantage head: (B, n_action), lane-aligned at its segment start.
        a = (jnp.dot(hb, wp_ref[:fin, ca:ca + n_action],
                     preferred_element_type=jnp.float32)
             + bp_ref[:, ca:ca + n_action])

        # Fused bias column:  bias[i] = v[i] - mean_k(adv[i, k])  via one (H,1) matmul.
        bias_col = (jnp.dot(hb, wp_ref[:fin, cb:cb + 1],
                            preferred_element_type=jnp.float32)
                    + bp_ref[:, cb:cb + 1])                       # (B, 1)

        # Bug-faithful PyTorch broadcast (requires batch == n_action):
        #   q[i, j] = a[i, j] + v[j] - mean_k a[j, k]
        q_ref[...] = a + bias_col[:, 0][None, :]

    return kernel


def dueling_forward(x, wp, bp, *, n_state, n_action, hidden_sizes):
    """x: (B, n_state) f32, wp: packed bf16 weights, bp: packed f32 bias row -> (B, n_action) f32."""
    batch = x.shape[0]
    assert batch == n_action, "reference broadcast only defined for batch == n_action"
    kernel = _make_kernel(n_state, n_action, tuple(hidden_sizes))
    vmem = pl.BlockSpec(memory_space=pltpu.MemorySpace.VMEM)  # full arrays, grid-less
    return pl.pallas_call(
        kernel,
        out_shape=jax.ShapeDtypeStruct((batch, n_action), jnp.float32),
        in_specs=[vmem, vmem, vmem],
        out_specs=vmem,
    )(x, wp, bp)


# ----------------------------- parameter handling -----------------------------

def kaiming_normal(key, fan_in, fan_out):
    # torch.nn.init.kaiming_normal_(mode='fan_in', nonlinearity='leaky_relu') with
    # its default a=0  ->  gain = sqrt(2), std = gain / sqrt(fan_in).
    std = jnp.sqrt(2.0 / jnp.float32(fan_in))
    return jax.random.normal(key, (fan_in, fan_out), jnp.float32) * std


def init_params(key, n_state, n_action, hidden_sizes):
    """Raw PyTorch-equivalent layers: [(w, b), ...] with w (in, out), b (out,), zero biases."""
    sizes = [n_state] + list(hidden_sizes) + [n_action + 1]
    layers = []
    for i in range(len(sizes) - 1):
        key, sub = jax.random.split(key)
        layers.append((kaiming_normal(sub, sizes[i], sizes[i + 1]),
                       jnp.zeros((sizes[i + 1],), jnp.float32)))
    return layers


def pack_params(layers, n_state, n_action, hidden_sizes):
    """Pack all weights into one lane-padded bf16 buffer (128-aligned column segments)
    and all biases into one f32 row; fold the value head + advantage mean into a
    single bias column (w_v - mean(w_a), b_v - mean(b_a))."""
    dims = [n_state] + list(hidden_sizes)
    n_hidden = len(hidden_sizes)
    seg = _seg_width(n_action, hidden_sizes)
    n_seg = n_hidden + 2
    max_in = max(dims)

    wp = jnp.zeros((max_in, n_seg * seg), jnp.float32)
    bp = jnp.zeros((1, n_seg * seg), jnp.float32)
    for i in range(n_hidden):
        w, b = layers[i]
        c = i * seg
        wp = wp.at[:dims[i], c:c + dims[i + 1]].set(w)
        bp = bp.at[0, c:c + dims[i + 1]].set(b)

    w_out, b_out = layers[n_hidden]
    w_v, w_a = w_out[:, :1], w_out[:, 1:]          # value column / advantage columns
    b_v, b_a = b_out[:1], b_out[1:]
    w_bias = w_v - jnp.mean(w_a, axis=1, keepdims=True)   # (H, 1): v - mean(a) fused
    b_bias = b_v - jnp.mean(b_a, keepdims=True)           # (1,)

    ca, cb = n_hidden * seg, (n_hidden + 1) * seg
    wp = wp.at[:dims[-1], ca:ca + n_action].set(w_a)
    bp = bp.at[0, ca:ca + n_action].set(b_a)
    wp = wp.at[:dims[-1], cb:cb + 1].set(w_bias)
    bp = bp.at[0, cb:cb + 1].set(b_bias)
    return wp.astype(jnp.bfloat16), bp


def dueling_reference(x, layers, matmul_dtype=jnp.float32):
    """Pure-JAX reference mirroring the PyTorch forward (incl. its broadcast)."""
    h = x
    for i, (w, b) in enumerate(layers):
        z = jnp.dot(h.astype(matmul_dtype), w.astype(matmul_dtype),
                    preferred_element_type=jnp.float32) + b
        h = jnp.maximum(z, 0.0) if i < len(layers) - 1 else z
    v = h[:, 0]
    a = h[:, 1:]
    return a + v[None, :] - jnp.mean(a, axis=1)[None, :]


if __name__ == "__main__":
    n_state = 16
    n_action = 8
    hidden_sizes = (32, 32)   # args.hidden_sizes stand-in
    batch = 8                 # == n_action so the reference broadcast is well-defined

    key = jax.random.PRNGKey(0)
    kx, kp = jax.random.split(key)
    x = jax.random.normal(kx, (batch, n_state), jnp.float32)
    layers = init_params(kp, n_state, n_action, hidden_sizes)
    wp, bp = pack_params(layers, n_state, n_action, hidden_sizes)

    q = dueling_forward(x, wp, bp, n_state=n_state, n_action=n_action,
                        hidden_sizes=hidden_sizes)
    jax.block_until_ready(q)

    assert q.shape == (batch, n_action) and q.dtype == jnp.float32
    # Primary check: reference run with the same bf16 matmul operands (f32 accum).
    q_ref_bf16 = dueling_reference(x, layers, matmul_dtype=jnp.bfloat16)
    assert bool(jnp.allclose(q, q_ref_bf16, rtol=2e-2, atol=2e-2)), "mismatch vs bf16 reference"
    # Secondary check: full-f32 PyTorch-equivalent reference (bounds bf16 approximation).
    q_ref_f32 = dueling_reference(x, layers, matmul_dtype=jnp.float32)
    assert bool(jnp.allclose(q, q_ref_f32, rtol=6e-2, atol=6e-2)), "mismatch vs f32 reference"
    print("KERNEL_OK")
</pallas_src>

<mosaic_0001>
module attributes {stable_mosaic.version = 11 : i64} {
  func.func @kernel(%arg0: memref<8x16xf32, #tpu.memory_space<vmem>>, %arg1: memref<32x512xbf16, #tpu.memory_space<vmem>>, %arg2: memref<1x512xf32, #tpu.memory_space<vmem>>, %arg3: memref<8x8xf32, #tpu.memory_space<vmem>>) attributes {dimension_semantics = [], scalar_prefetch = 0 : i64, scratch_operands = 0 : i64, tpu.core_type = #tpu.core_type<tc>} {
    %c0 = arith.constant 0 : index
    %c0_0 = arith.constant 0 : index
    %0 = vector.load %arg0[%c0, %c0_0] : memref<8x16xf32, #tpu.memory_space<vmem>>, vector<8x16xf32>
    %1 = arith.truncf %0 : vector<8x16xf32> to vector<8x16xbf16>
    %c0_1 = arith.constant 0 : index
    %c0_2 = arith.constant 0 : index
    %2 = vector.load %arg1[%c0_1, %c0_2] : memref<32x512xbf16, #tpu.memory_space<vmem>>, vector<16x32xbf16>
    %cst = arith.constant dense<0.000000e+00> : vector<8x32xf32>
    %3 = tpu.matmul %1, %2, %cst {dimension_numbers = #tpu.dot_dimension_numbers<[1], [0], [0], [1], [0, 0, 1, 1], [], []>} : vector<8x16xbf16>, vector<16x32xbf16>, vector<8x32xf32> -> vector<8x32xf32>
    %c0_3 = arith.constant 0 : index
    %c0_4 = arith.constant 0 : index
    %4 = vector.load %arg2[%c0_3, %c0_4] : memref<1x512xf32, #tpu.memory_space<vmem>>, vector<1x32xf32>
    %5 = vector.broadcast %4 : vector<1x32xf32> to vector<8x32xf32>
    %6 = arith.addf %3, %5 : vector<8x32xf32>
    %cst_5 = arith.constant 0.000000e+00 : f32
    %7 = vector.broadcast %cst_5 : f32 to vector<8x32xf32>
    %8 = arith.maximumf %6, %7 : vector<8x32xf32>
    %9 = arith.truncf %8 : vector<8x32xf32> to vector<8x32xbf16>
    %c0_6 = arith.constant 0 : index
    %c128 = arith.constant 128 : index
    %10 = vector.load %arg1[%c0_6, %c128] : memref<32x512xbf16, #tpu.memory_space<vmem>>, vector<32x32xbf16>
    %cst_7 = arith.constant dense<0.000000e+00> : vector<8x32xf32>
    %11 = tpu.matmul %9, %10, %cst_7 {dimension_numbers = #tpu.dot_dimension_numbers<[1], [0], [0], [1], [0, 0, 1, 1], [], []>} : vector<8x32xbf16>, vector<32x32xbf16>, vector<8x32xf32> -> vector<8x32xf32>
    %c0_8 = arith.constant 0 : index
    %c128_9 = arith.constant 128 : index
    %12 = vector.load %arg2[%c0_8, %c128_9] : memref<1x512xf32, #tpu.memory_space<vmem>>, vector<1x32xf32>
    %13 = vector.broadcast %12 : vector<1x32xf32> to vector<8x32xf32>
    %14 = arith.addf %11, %13 : vector<8x32xf32>
    %cst_10 = arith.constant 0.000000e+00 : f32
    %15 = vector.broadcast %cst_10 : f32 to vector<8x32xf32>
    %16 = arith.maximumf %14, %15 : vector<8x32xf32>
    %17 = arith.truncf %16 : vector<8x32xf32> to vector<8x32xbf16>
    %c0_11 = arith.constant 0 : index
    %c256 = arith.constant 256 : index
    %18 = vector.load %arg1[%c0_11, %c256] : memref<32x512xbf16, #tpu.memory_space<vmem>>, vector<32x8xbf16>
    %cst_12 = arith.constant dense<0.000000e+00> : vector<8x8xf32>
    %19 = tpu.matmul %17, %18, %cst_12 {dimension_numbers = #tpu.dot_dimension_numbers<[1], [0], [0], [1], [0, 0, 1, 1], [], []>} : vector<8x32xbf16>, vector<32x8xbf16>, vector<8x8xf32> -> vector<8x8xf32>
    %c0_13 = arith.constant 0 : index
    %c256_14 = arith.constant 256 : index
    %20 = vector.load %arg2[%c0_13, %c256_14] : memref<1x512xf32, #tpu.memory_space<vmem>>, vector<1x8xf32>
    %21 = vector.broadcast %20 : vector<1x8xf32> to vector<8x8xf32>
    %22 = arith.addf %19, %21 : vector<8x8xf32>
    %c0_15 = arith.constant 0 : index
    %c384 = arith.constant 384 : index
    %23 = vector.load %arg1[%c0_15, %c384] : memref<32x512xbf16, #tpu.memory_space<vmem>>, vector<32x1xbf16>
    %cst_16 = arith.constant dense<0.000000e+00> : vector<8x1xf32>
    %24 = tpu.matmul %17, %23, %cst_16 {dimension_numbers = #tpu.dot_dimension_numbers<[1], [0], [0], [1], [0, 0, 1, 1], [], []>} : vector<8x32xbf16>, vector<32x1xbf16>, vector<8x1xf32> -> vector<8x1xf32>
    %c0_17 = arith.constant 0 : index
    %c384_18 = arith.constant 384 : index
    %25 = vector.load %arg2[%c0_17, %c384_18] : memref<1x512xf32, #tpu.memory_space<vmem>>, vector<1x1xf32>
    %26 = vector.broadcast %25 : vector<1x1xf32> to vector<8x1xf32>
    %27 = arith.addf %24, %26 : vector<8x1xf32>
    %28 = vector.shape_cast %27 : vector<8x1xf32> to vector<8xf32>
    %29 = vector.shape_cast %28 : vector<8xf32> to vector<1x8xf32>
    %30 = vector.broadcast %29 : vector<1x8xf32> to vector<8x8xf32>
    %31 = arith.addf %22, %30 : vector<8x8xf32>
    %c0_19 = arith.constant 0 : index
    %c0_20 = arith.constant 0 : index
    %32 = vector.load %arg3[%c0_19, %c0_20] : memref<8x8xf32, #tpu.memory_space<vmem>>, vector<8x8xf32>
    tpu.vector_store %arg3[%c0_19, %c0_20], %31 {strides = array<i32>} : memref<8x8xf32, #tpu.memory_space<vmem>>, vector<8x8xf32>,
    return
  }
}

</mosaic_0001>

<llo_original>
// kernel: tpu_custom_call.1
$region0: #{tpu_custom_call.1}
  #allocation0 [shape = 'u32[]', space=smem, size = 0x4, offset = 0x4, fixed_abs, tag = 'smem constant byte address 0x4 - core index']
  #allocation1 [shape = 'u32[72,128]{1,0:T(1,128)}', space=vmem, size = 0x9000, scoped, tag = 'internal scratch']
  %s0 = inlined_call_operand.hbm [shape: f32[8,16], index: 0, kind: input, shape index: {}]
  %s1 = inlined_call_operand.hbm [shape: bf16[32,512], index: 1, kind: input, shape index: {}]
  %s2 = inlined_call_operand.hbm [shape: f32[1,512], index: 2, kind: input, shape index: {}]
  %s3 = inlined_call_operand.hbm [shape: f32[8,8], index: 3, kind: output, shape index: {}]
  %s4 = sld [smem:[#allocation0]]
  $region34: #{tpu_custom_call.1} parent=0
    _
  %s6 = ssub.s32 1, %s4
  %s7 = scalar_select 0, %s6, %s4
  $region1: #{tpu_custom_call.1} parent=0
    #allocation2 [shape = 'u8[4096]{0}', space=vmem, size = 0x1000, scoped, tag = 'input window, operand 0, single buffered']
    #allocation3 [shape = 's32[1]{0}', space=sflag, size = 0x4, scoped, tag = 'scoped memory for tpu_custom_call.1']
    #allocation4 [shape = 's32[1]{0}', space=sflag, size = 0x4, scoped, tag = 'scoped memory for tpu_custom_call.1']
    #allocation5 [shape = 'u8[32768]{0}', space=vmem, size = 0x8000, scoped, tag = 'input window, operand 1, single buffered']
    #allocation6 [shape = 's32[1]{0}', space=sflag, size = 0x4, scoped, tag = 'scoped memory for tpu_custom_call.1']
    #allocation7 [shape = 'u8[2048]{0}', space=vmem, size = 0x800, scoped, tag = 'input window, operand 2, single buffered']
    #allocation8 [shape = 'u8[4096]{0}', space=vmem, size = 0x1000, scoped, tag = 'output window, operand 0, single buffered']
    %8 = vsyncpa [#allocation3], 0
    %9 = vsyncpa [#allocation6], 0
    %10 = vsyncpa [#allocation4], 0
    // Predicated region
    $region2: #{tpu_custom_call.1} parent=1 // pred_check
      _
    $region3: #{tpu_custom_call.1} parent=1 // pred_check_branch
      %12 = sbr.rel (0) target = $region5
    $region4: #{tpu_custom_call.1} parent=1 // pred_region
      %14 = vsyncadd [#allocation3], 0
      %s16 = sshll.u32 %s0, 4
      %s17 = int_to_ptr.hbm [resolvable:$true] %s16
      %s18 = sshll.u32 [#allocation2], 4
      %s19 = int_to_ptr.vmem [resolvable:$true] %s18
      %21 = dma.hbm_to_vmem [thread:$0]  %s17, 128, %s19, [#allocation3]
    $region5: #{tpu_custom_call.1} parent=1 // pred_fallthru
      _
    // Predicated region
    $region6: #{tpu_custom_call.1} parent=1 // pred_check
      _
    $region7: #{tpu_custom_call.1} parent=1 // pred_check_branch
      %23 = sbr.rel (0) target = $region9
    $region8: #{tpu_custom_call.1} parent=1 // pred_region
      %25 = vsyncadd [#allocation6], 0
      %s26 = sshll.u32 %s1, 4
      %s27 = int_to_ptr.hbm [resolvable:$true] %s26
      %s28 = sshll.u32 [#allocation5], 4
      %s29 = int_to_ptr.vmem [resolvable:$true] %s28
      %34 = dma.hbm_to_vmem [thread:$0]  %s27, 1024, %s29, [#allocation6], 256, 256, 16
    $region9: #{tpu_custom_call.1} parent=1 // pred_fallthru
      _
    // Predicated region
    $region10: #{tpu_custom_call.1} parent=1 // pred_check
      _
    $region11: #{tpu_custom_call.1} parent=1 // pred_check_branch
      %36 = sbr.rel (0) target = $region13
    $region12: #{tpu_custom_call.1} parent=1 // pred_region
      %38 = vsyncadd [#allocation6], 0
      %s40 = sshll.u32 %s2, 4
      %s41 = int_to_ptr.hbm [resolvable:$true] %s40
      %s42 = sshll.u32 [#allocation7], 4
      %s43 = int_to_ptr.vmem [resolvable:$true] %s42
      %45 = dma.hbm_to_vmem [thread:$0]  %s41, 64, %s43, [#allocation6]
    $region13: #{tpu_custom_call.1} parent=1 // pred_fallthru
      _
    // Predicated region
    $region14: #{tpu_custom_call.1} parent=1 // pred_check
      _
    $region15: #{tpu_custom_call.1} parent=1 // pred_check_branch
      %47 = sbr.rel (0) target = $region17
    $region16: #{tpu_custom_call.1} parent=1 // pred_region
      %49 = dma.done [#allocation3], 128
    $region17: #{tpu_custom_call.1} parent=1 // pred_fallthru
      _
    // Predicated region
    $region18: #{tpu_custom_call.1} parent=1 // pred_check
      _
    $region19: #{tpu_custom_call.1} parent=1 // pred_check_branch
      %51 = sbr.rel (0) target = $region21
    $region20: #{tpu_custom_call.1} parent=1 // pred_region
      %53 = dma.done [#allocation6], 1024
    $region21: #{tpu_custom_call.1} parent=1 // pred_fallthru
      _
    // Predicated region
    $region22: #{tpu_custom_call.1} parent=1 // pred_check
      _
    $region23: #{tpu_custom_call.1} parent=1 // pred_check_branch
      %55 = sbr.rel (0) target = $region25
    $region24: #{tpu_custom_call.1} parent=1 // pred_region
      %57 = dma.done [#allocation6], 64
    $region25: #{tpu_custom_call.1} parent=1 // pred_fallthru
      _
    %v59 = vld [vmem:[#allocation2] sm:$0xff]
    %v60 = vpack.c.bf16 %v59, %v59
    %v61 = vld [vmem:[#allocation5] sm:$0xf]
    %v62 = vld [vmem:[#allocation5 + $0x10] sm:$0xf]
    %v63 = vld [vmem:[#allocation7] sm:$0x1]
    %v65 = vperm.slane %v63, 0
    %v69 = vunpack.c.l.b16 %v61
    %v70 = vunpack.c.l.b16 %v62
    %v71 = vpack.c.b16 %v70, %v69
    %vm73 = vcmask 130048
    %v75 = vsel %vm73, %v60, 0
    %77 = vmatpush.bf16.msra.mxu0 0
    %78 = vmatpush.bf16.msra.mxu0 0
    %79 = vmatpush.bf16.msra.mxu0 0
    %80 = vmatpush.bf16.msra.mxu0 0
    %81 = vmatpush.bf16.msra.mxu0 0
    %82 = vmatpush.bf16.msra.mxu0 0
    %83 = vmatpush.bf16.msra.mxu0 0
    %84 = vmatpush.bf16.msra.mxu0 %v71
    %85 = vmatmul.bf16.gmra.mxu0 %v75
    %v86 = vpop.f32.mrf.mxu0
    %v87 = vadd.f32 %v65, %v86
    %v88 = vpop.f32.mrf.mxu0
    %89 = vdwg.mxu0
    %v90 = vmax.f32 %v87, 0.0
    %v91 = vpack.c.bf16 %v90, %v90
    %v92 = vld [vmem:[#allocation5 + $0x4] sm:$0xf]
    %v93 = vld [vmem:[#allocation5 + $0x14] sm:$0xf]
    %v94 = vld [vmem:[#allocation5 + $0x24] sm:$0xf]
    %v95 = vld [vmem:[#allocation5 + $0x34] sm:$0xf]
    %v96 = vld [vmem:[#allocation7 + $0x1] sm:$0x1]
    %v98 = vperm.slane %v96, 0
    %v104 = vunpack.c.l.b16 %v92
    %v105 = vunpack.c.l.b16 %v93
    %v106 = vunpack.c.l.b16 %v94
    %v107 = vunpack.c.l.b16 %v95
    %v108 = vpack.c.b16 %v105, %v104
    %v109 = vpack.c.b16 %v107, %v106
    %vm112 = vcmask 261120
    %v114 = vsel %vm112, %v91, 0
    %116 = vmatpush.bf16.msra.mxu0 0
    %117 = vmatpush.bf16.msra.mxu0 0
    %118 = vmatpush.bf16.msra.mxu0 0
    %119 = vmatpush.bf16.msra.mxu0 0
    %120 = vmatpush.bf16.msra.mxu0 0
    %121 = vmatpush.bf16.msra.mxu0 0
    %122 = vmatpush.bf16.msra.mxu0 %v109
    %123 = vmatpush.bf16.msra.mxu0 %v108
    %124 = vmatmul.bf16.gmra.mxu0 %v114
    %v125 = vpop.f32.mrf.mxu0
    %v126 = vadd.f32 %v98, %v125
    %v127 = vpop.f32.mrf.mxu0
    %128 = vdwg.mxu0
    %v129 = vmax.f32 %v126, 0.0
    %v130 = vpack.c.bf16 %v129, %v129
    %v131 = vld [vmem:[#allocation5 + $0x8] sm:$0xf]
    %v132 = vld [vmem:[#allocation5 + $0x18] sm:$0xf]
    %v133 = vld [vmem:[#allocation5 + $0x28] sm:$0xf]
    %v134 = vld [vmem:[#allocation5 + $0x38] sm:$0xf]
    %v135 = vld [vmem:[#allocation7 + $0x2] sm:$0x1]
    %v137 = vperm.slane %v135, 0
    %v143 = vunpack.c.l.b16 %v131
    %v144 = vunpack.c.l.b16 %v132
    %v145 = vunpack.c.l.b16 %v133
    %v146 = vunpack.c.l.b16 %v134
    %v147 = vpack.c.b16 %v144, %v143
    %v148 = vpack.c.b16 %v146, %v145
    %v152 = vsel %vm112, %v130, 0
    %154 = vmatpush.bf16.msra.mxu0 0
    %155 = vmatpush.bf16.msra.mxu0 0
    %156 = vmatpush.bf16.msra.mxu0 0
    %157 = vmatpush.bf16.msra.mxu0 0
    %158 = vmatpush.bf16.msra.mxu0 0
    %159 = vmatpush.bf16.msra.mxu0 0
    %160 = vmatpush.bf16.msra.mxu0 %v148
    %161 = vmatpush.bf16.msra.mxu0 %v147
    %162 = vmatmul.bf16.gmra.mxu0 %v152
    %v163 = vpop.f32.mrf.mxu0
    %v164 = vadd.f32 %v137, %v163
    %v165 = vpop.f32.mrf.mxu0
    %166 = vdwg.mxu0
    %v167 = vld [vmem:[#allocation5 + $0xc] sm:$0xf]
    %v168 = vld [vmem:[#allocation5 + $0x1c] sm:$0xf]
    %v169 = vld [vmem:[#allocation5 + $0x2c] sm:$0xf]
    %v170 = vld [vmem:[#allocation5 + $0x3c] sm:$0xf]
    %v171 = vld [vmem:[#allocation7 + $0x3] sm:$0x1]
    %v173 = vperm.slane %v171, 0
    %v179 = vunpack.c.l.b16 %v167
    %v180 = vunpack.c.l.b16 %v168
    %v181 = vunpack.c.l.b16 %v169
    %v182 = vunpack.c.l.b16 %v170
    %v183 = vpack.c.b16 %v180, %v179
    %v184 = vpack.c.b16 %v182, %v181
    %187 = vmatpush.bf16.msra.mxu0 0
    %188 = vmatpush.bf16.msra.mxu0 0
    %189 = vmatpush.bf16.msra.mxu0 0
    %190 = vmatpush.bf16.msra.mxu0 0
    %191 = vmatpush.bf16.msra.mxu0 0
    %192 = vmatpush.bf16.msra.mxu0 0
    %193 = vmatpush.bf16.msra.mxu0 %v184
    %194 = vmatpush.bf16.msra.mxu0 %v183
    %195 = vmatmul.bf16.gmra.mxu0 %v152
    %v196 = vpop.f32.mrf.mxu0
    %v197 = vadd.f32 %v173, %v196
    %v198 = vpop.f32.mrf.mxu0
    %199 = vdwg.mxu0
    %201 = vset.pattern.permute.xlu0 0
    %202 = vperm.xlu0 %201, %v197
    %v203 = vpop.permute.xlu0 %202
    %v204 = vlaneseq
    %v205 = vand.u32 %v204, 127
    %v206 = vperm.slane %v203, %v205
    %vm207 = vcmask 1042434
    %v208 = vsel %vm207, %v206, %v206
    %vm209 = vcmask 1043459
    %v210 = vsel %vm209, %v206, %v208
    %vm211 = vcmask 1044484
    %v212 = vsel %vm211, %v206, %v210
    %vm213 = vcmask 1045509
    %v214 = vsel %vm213, %v206, %v212
    %vm215 = vcmask 1046534
    %v216 = vsel %vm215, %v206, %v214
    %vm217 = vcmask 1047559
    %v218 = vsel %vm217, %v206, %v216
    %v220 = vadd.f32 %v164, %v218
    %vm221 = vcmask 64512
    %222 = vst.msk [vmem:[#allocation8] sm:$0xff] %vm221, %v220
    // Predicated region
    $region26: #{tpu_custom_call.1} parent=1 // pred_check
      _
    $region27: #{tpu_custom_call.1} parent=1 // pred_check_branch
      %224 = sbr.rel (0) target = $region29
    $region28: #{tpu_custom_call.1} parent=1 // pred_region
      %226 = vsyncadd [#allocation4], 0
      %s228 = sshll.u32 [#allocation8], 4
      %s229 = int_to_ptr.vmem [resolvable:$true] %s228
      %s230 = sshll.u32 %s3, 4
      %s231 = int_to_ptr.hbm [resolvable:$true] %s230
      %233 = dma.vmem_to_hbm [thread:$0]  %s229, 128, %s231, [#allocation4]
    $region29: #{tpu_custom_call.1} parent=1 // pred_fallthru
      _
    // Predicated region
    $region30: #{tpu_custom_call.1} parent=1 // pred_check
      _
    $region31: #{tpu_custom_call.1} parent=1 // pred_check_branch
      %235 = sbr.rel (0) target = $region33
    $region32: #{tpu_custom_call.1} parent=1 // pred_region
      %237 = dma.done [#allocation4], 128
    $region33: #{tpu_custom_call.1} parent=1 // pred_fallthru
      _
    %238 = vsyncpa [#allocation3], 1
    %239 = vsyncpa [#allocation6], 1
    %240 = vsyncpa [#allocation4], 1

</llo_original>
